<compile_context>
chip_gen: v7x
topology: tpu7x:2x2x1
jax: 0.10.0
libtpu: 0.0.40
codegen_flags: <defaults>
</compile_context>

<pallas_src>
import math
from functools import partial

import jax
import jax.numpy as jnp
from jax import lax
from jax.experimental import pallas as pl
from jax.experimental.pallas import tpu as pltpu


def _round_up(x, m):
    return -(-x // m) * m


def _fused_mlp_kernel(x_ref, w_ref, b_ref, o_ref, h_scratch):
    """o = (((x @ W0 + b0) @ W1 + b1) ... ) for all stacked, pre-transposed layers.

    x_ref:     (bt, in_dim)   raw (unpadded) activations
    w_ref:     (L, PAD, PAD)  weights, already (in, out) layout, zero-padded
    b_ref:     (L, PAD)       biases, zero-padded
    o_ref:     (bt, PAD)      lane-dense output (wrapper slices to out_dim)
    h_scratch: (bt, PAD) f32  VMEM buffer used to widen x to PAD lanes
    """
    in_dim = x_ref.shape[-1]
    n_layers = w_ref.shape[0]
    compute_dtype = w_ref.dtype

    # Widen x (bt, in_dim) -> (bt, PAD) entirely inside VMEM: zero the scratch,
    # masked-store the real columns, load the full lane-dense tile back.
    h_scratch[...] = jnp.zeros_like(h_scratch)
    h_scratch[:, :in_dim] = x_ref[...].astype(h_scratch.dtype)
    h0 = h_scratch[...]

    def body(i, h):
        w = w_ref[i]                   # (PAD, PAD), (in, out) -> no in-kernel transpose
        b = b_ref[pl.ds(i, 1), :]      # (1, PAD)
        return jnp.dot(h.astype(compute_dtype), w,
                       preferred_element_type=jnp.float32) + b

    # The layer chain is serially dependent, so full unroll stops paying off
    # after a few layers; cap the unroll to keep code size / compile time sane.
    h = lax.fori_loop(0, n_layers, body, h0, unroll=min(int(n_layers), 8))
    o_ref[...] = h.astype(o_ref.dtype)


def init_toy_model_params(key, h, layers, in_dim=10, out_dim=5, dtype=jnp.float32):
    """PyTorch nn.Linear default init: U(-1/sqrt(fan_in), 1/sqrt(fan_in))."""
    dims = [(in_dim, h)] + [(h, h)] * layers + [(h, out_dim)]
    params = []
    for fan_in, fan_out in dims:
        key, kw, kb = jax.random.split(key, 3)
        bound = 1.0 / math.sqrt(fan_in)
        w = jax.random.uniform(kw, (fan_out, fan_in), dtype, minval=-bound, maxval=bound)
        b = jax.random.uniform(kb, (fan_out,), dtype, minval=-bound, maxval=bound)
        params.append((w, b))
    return params


def pack_toy_model_params(params, compute_dtype=None):
    """Pre-transpose + zero-pad every layer to (PAD, PAD) and stack.

    PAD = round_up(max feature dim, 128), so arbitrary h / in_dim / out_dim work.
    Returns (w_stack (L,PAD,PAD) in (in,out) layout, b_stack (L,PAD) f32,
    in_dim, out_dim). Weights auto-downcast to bf16 for wide models (PAD>=512);
    biases stay f32 (added after the f32 MXU accumulation).
    """
    L = len(params)
    in_dim = params[0][0].shape[1]
    out_dim = params[-1][0].shape[0]
    max_dim = max(max(w.shape) for w, _ in params)
    pad = _round_up(max_dim, 128)
    if compute_dtype is None:
        compute_dtype = jnp.bfloat16 if pad >= 512 else jnp.float32

    w_stack = jnp.zeros((L, pad, pad), compute_dtype)
    b_stack = jnp.zeros((L, pad), jnp.float32)
    for i, (w, b) in enumerate(params):
        out_f, in_f = w.shape
        w_stack = w_stack.at[i, :in_f, :out_f].set(w.T.astype(compute_dtype))
        b_stack = b_stack.at[i, :out_f].set(b.astype(jnp.float32))
    return w_stack, b_stack, in_dim, out_dim


def _choose_batch_tile(pb0):
    """Pick the batch tile size. `pb0` is batch rounded up to 8 sublanes."""
    if pb0 <= 8:
        return pb0                          # one step; can't split below 8 rows
    if pb0 <= 512:
        # At least 2 tiles so the "parallel" axis can shard across v7x's 2 TCs.
        return max(8, _round_up(pb0 // 2, 8))
    # v6e/v7x MXU is 256 wide: 256-row tiles fill it, amortize the ~0.35us/step
    # pipeline overhead, and stay trivially within VMEM (bt*PAD*4 per buffer).
    return 256


@partial(jax.jit, static_argnames=("out_dim",))
def toy_model_forward(x, w_stack, b_stack, *, out_dim):
    """Fused ToyModel forward: one pallas_call for the entire Linear stack."""
    batch, in_dim = x.shape
    L, pad, _ = w_stack.shape

    pb0 = _round_up(batch, 8)
    bt = _choose_batch_tile(pb0)
    pb = _round_up(pb0, bt)

    x_in = x.astype(jnp.float32)
    if pb != batch:
        # Row-only padding to a whole number of tiles (no feature-dim padding
        # of x is ever materialized in HBM).
        x_in = jnp.zeros((pb, in_dim), jnp.float32).at[:batch].set(x_in)

    out = pl.pallas_call(
        _fused_mlp_kernel,
        out_shape=jax.ShapeDtypeStruct((pb, pad), jnp.float32),
        grid_spec=pltpu.PrefetchScalarGridSpec(
            num_scalar_prefetch=0,
            grid=(pb // bt,),
            in_specs=[
                # Activations: tiled over batch; last dim = full (unpadded) in_dim.
                pl.BlockSpec((bt, in_dim), lambda i: (i, 0)),
                # Grid-invariant weight/bias stacks: single-buffered (VMEM-resident,
                # no 2x double-buffer, no re-issued DMA across batch steps).
                pl.BlockSpec((L, pad, pad), lambda i: (0, 0, 0),
                             pipeline_mode=pl.Buffered(1)),
                pl.BlockSpec((L, pad), lambda i: (0, 0),
                             pipeline_mode=pl.Buffered(1)),
            ],
            out_specs=pl.BlockSpec((bt, pad), lambda i: (i, 0)),
            scratch_shapes=[pltpu.VMEM((bt, pad), jnp.float32)],
        ),
        compiler_params=pltpu.CompilerParams(
            dimension_semantics=("parallel",)),  # batch tiles shard across TCs
    )(x_in, w_stack, b_stack)

    return out[:batch, :out_dim]


def toy_model_forward_ref(x, params):
    """Pure-JAX reference (PyTorch convention: y = x @ W.T + b)."""
    for w, b in params:
        x = x @ w.T + b
    return x


if __name__ == "__main__":
    H = 32        # hidden width h
    LAYERS = 2    # number of intermediate Linear(h, h) layers
    BATCH = 8

    key = jax.random.PRNGKey(0)
    key, kx = jax.random.split(key)
    x = jax.random.normal(kx, (BATCH, 10), dtype=jnp.float32)

    params = init_toy_model_params(key, H, LAYERS)
    w_stack, b_stack, in_dim, out_dim = pack_toy_model_params(params)

    y = toy_model_forward(x, w_stack, b_stack, out_dim=out_dim)
    y = jax.block_until_ready(y)

    y_ref = toy_model_forward_ref(x, params)
    assert y.shape == (BATCH, 5), y.shape
    max_err = float(jnp.max(jnp.abs(y - y_ref)))
    assert jnp.allclose(y, y_ref, atol=1e-4, rtol=1e-4), max_err

    print("KERNEL_OK")
</pallas_src>

<mosaic_0001>
module attributes {stable_mosaic.version = 11 : i64} {
  func.func @_fused_mlp_kernel(%arg0: i32, %arg1: memref<8x10xf32, #tpu.memory_space<vmem>>, %arg2: memref<4x128x128xf32, #tpu.memory_space<vmem>>, %arg3: memref<4x128xf32, #tpu.memory_space<vmem>>, %arg4: memref<8x128xf32, #tpu.memory_space<vmem>>, %arg5: memref<8x128xf32, #tpu.memory_space<vmem>>) attributes {dimension_semantics = [#tpu.dimension_semantics<parallel>], iteration_bounds = array<i64: 1>, scalar_prefetch = 0 : i64, scratch_operands = 1 : i64, tpu.core_type = #tpu.core_type<tc>, window_params = [{transform_indices = @transform_0, window_bounds = array<i64: 8, 10>}, {pipeline_mode = #tpu.pipeline_mode<synchronous>, transform_indices = @transform_1, window_bounds = array<i64: 4, 128, 128>}, {pipeline_mode = #tpu.pipeline_mode<synchronous>, transform_indices = @transform_2, window_bounds = array<i64: 4, 128>}, {transform_indices = @transform_3, window_bounds = array<i64: 8, 128>}]} {
    %cst = arith.constant 0.000000e+00 : f32
    %0 = vector.broadcast %cst : f32 to vector<8x128xf32>
    %c0 = arith.constant 0 : index
    %c0_0 = arith.constant 0 : index
    %1 = vector.load %arg5[%c0, %c0_0] : memref<8x128xf32, #tpu.memory_space<vmem>>, vector<8x128xf32>
    tpu.vector_store %arg5[%c0, %c0_0], %0 {strides = array<i32>} : memref<8x128xf32, #tpu.memory_space<vmem>>, vector<8x128xf32>,
    %c0_1 = arith.constant 0 : index
    %c0_2 = arith.constant 0 : index
    %2 = vector.load %arg1[%c0_1, %c0_2] : memref<8x10xf32, #tpu.memory_space<vmem>>, vector<8x10xf32>
    %c0_3 = arith.constant 0 : index
    %c0_4 = arith.constant 0 : index
    %3 = vector.load %arg5[%c0_3, %c0_4] : memref<8x128xf32, #tpu.memory_space<vmem>>, vector<8x10xf32>
    tpu.vector_store %arg5[%c0_3, %c0_4], %2 {strides = array<i32>} : memref<8x128xf32, #tpu.memory_space<vmem>>, vector<8x10xf32>,
    %c0_5 = arith.constant 0 : index
    %c0_6 = arith.constant 0 : index
    %4 = vector.load %arg5[%c0_5, %c0_6] : memref<8x128xf32, #tpu.memory_space<vmem>>, vector<8x128xf32>
    %c0_i32 = arith.constant 0 : i32
    %5 = arith.index_cast %c0_i32 : i32 to index
    %c0_7 = arith.constant 0 : index
    %c0_8 = arith.constant 0 : index
    %6 = vector.load %arg2[%5, %c0_7, %c0_8] : memref<4x128x128xf32, #tpu.memory_space<vmem>>, vector<1x128x128xf32>
    %7 = vector.shape_cast %6 : vector<1x128x128xf32> to vector<128x128xf32>
    %8 = arith.index_cast %c0_i32 : i32 to index
    %c0_9 = arith.constant 0 : index
    %9 = vector.load %arg3[%8, %c0_9] : memref<4x128xf32, #tpu.memory_space<vmem>>, vector<1x128xf32>
    %cst_10 = arith.constant dense<0.000000e+00> : vector<8x128xf32>
    %10 = tpu.matmul %4, %7, %cst_10 {dimension_numbers = #tpu.dot_dimension_numbers<[1], [0], [0], [1], [0, 0, 1, 1], [], []>} : vector<8x128xf32>, vector<128x128xf32>, vector<8x128xf32> -> vector<8x128xf32>
    %11 = vector.broadcast %9 : vector<1x128xf32> to vector<8x128xf32>
    %12 = arith.addf %10, %11 : vector<8x128xf32>
    %c1_i32 = arith.constant 1 : i32
    %13 = arith.index_cast %c1_i32 : i32 to index
    %c0_11 = arith.constant 0 : index
    %c0_12 = arith.constant 0 : index
    %14 = vector.load %arg2[%13, %c0_11, %c0_12] : memref<4x128x128xf32, #tpu.memory_space<vmem>>, vector<1x128x128xf32>
    %15 = vector.shape_cast %14 : vector<1x128x128xf32> to vector<128x128xf32>
    %16 = arith.index_cast %c1_i32 : i32 to index
    %c0_13 = arith.constant 0 : index
    %17 = vector.load %arg3[%16, %c0_13] : memref<4x128xf32, #tpu.memory_space<vmem>>, vector<1x128xf32>
    %cst_14 = arith.constant dense<0.000000e+00> : vector<8x128xf32>
    %18 = tpu.matmul %12, %15, %cst_14 {dimension_numbers = #tpu.dot_dimension_numbers<[1], [0], [0], [1], [0, 0, 1, 1], [], []>} : vector<8x128xf32>, vector<128x128xf32>, vector<8x128xf32> -> vector<8x128xf32>
    %19 = vector.broadcast %17 : vector<1x128xf32> to vector<8x128xf32>
    %20 = arith.addf %18, %19 : vector<8x128xf32>
    %c2_i32 = arith.constant 2 : i32
    %21 = arith.index_cast %c2_i32 : i32 to index
    %c0_15 = arith.constant 0 : index
    %c0_16 = arith.constant 0 : index
    %22 = vector.load %arg2[%21, %c0_15, %c0_16] : memref<4x128x128xf32, #tpu.memory_space<vmem>>, vector<1x128x128xf32>
    %23 = vector.shape_cast %22 : vector<1x128x128xf32> to vector<128x128xf32>
    %24 = arith.index_cast %c2_i32 : i32 to index
    %c0_17 = arith.constant 0 : index
    %25 = vector.load %arg3[%24, %c0_17] : memref<4x128xf32, #tpu.memory_space<vmem>>, vector<1x128xf32>
    %cst_18 = arith.constant dense<0.000000e+00> : vector<8x128xf32>
    %26 = tpu.matmul %20, %23, %cst_18 {dimension_numbers = #tpu.dot_dimension_numbers<[1], [0], [0], [1], [0, 0, 1, 1], [], []>} : vector<8x128xf32>, vector<128x128xf32>, vector<8x128xf32> -> vector<8x128xf32>
    %27 = vector.broadcast %25 : vector<1x128xf32> to vector<8x128xf32>
    %28 = arith.addf %26, %27 : vector<8x128xf32>
    %c3_i32 = arith.constant 3 : i32
    %29 = arith.index_cast %c3_i32 : i32 to index
    %c0_19 = arith.constant 0 : index
    %c0_20 = arith.constant 0 : index
    %30 = vector.load %arg2[%29, %c0_19, %c0_20] : memref<4x128x128xf32, #tpu.memory_space<vmem>>, vector<1x128x128xf32>
    %31 = vector.shape_cast %30 : vector<1x128x128xf32> to vector<128x128xf32>
    %32 = arith.index_cast %c3_i32 : i32 to index
    %c0_21 = arith.constant 0 : index
    %33 = vector.load %arg3[%32, %c0_21] : memref<4x128xf32, #tpu.memory_space<vmem>>, vector<1x128xf32>
    %cst_22 = arith.constant dense<0.000000e+00> : vector<8x128xf32>
    %34 = tpu.matmul %28, %31, %cst_22 {dimension_numbers = #tpu.dot_dimension_numbers<[1], [0], [0], [1], [0, 0, 1, 1], [], []>} : vector<8x128xf32>, vector<128x128xf32>, vector<8x128xf32> -> vector<8x128xf32>
    %35 = vector.broadcast %33 : vector<1x128xf32> to vector<8x128xf32>
    %36 = arith.addf %34, %35 : vector<8x128xf32>
    %c4_i32 = arith.constant 4 : i32
    %c0_23 = arith.constant 0 : index
    %c0_24 = arith.constant 0 : index
    %37 = vector.load %arg4[%c0_23, %c0_24] : memref<8x128xf32, #tpu.memory_space<vmem>>, vector<8x128xf32>
    tpu.vector_store %arg4[%c0_23, %c0_24], %36 {strides = array<i32>} : memref<8x128xf32, #tpu.memory_space<vmem>>, vector<8x128xf32>,
    return
  }
  func.func @transform_0(%arg0: i32) -> (i32, i32) {
    %c0_i32 = arith.constant 0 : i32
    %c0_i32_0 = arith.constant 0 : i32
    return %arg0, %c0_i32 : i32, i32
  }
  func.func @transform_1(%arg0: i32) -> (i32, i32, i32) {
    %c0_i32 = arith.constant 0 : i32
    %c0_i32_0 = arith.constant 0 : i32
    %c0_i32_1 = arith.constant 0 : i32
    %c0_i32_2 = arith.constant 0 : i32
    return %c0_i32, %c0_i32_0, %c0_i32_1 : i32, i32, i32
  }
  func.func @transform_2(%arg0: i32) -> (i32, i32) {
    %c0_i32 = arith.constant 0 : i32
    %c0_i32_0 = arith.constant 0 : i32
    %c0_i32_1 = arith.constant 0 : i32
    return %c0_i32, %c0_i32_0 : i32, i32
  }
  func.func @transform_3(%arg0: i32) -> (i32, i32) {
    %c0_i32 = arith.constant 0 : i32
    %c0_i32_0 = arith.constant 0 : i32
    return %arg0, %c0_i32 : i32, i32
  }
}

</mosaic_0001>

<llo_original>
// kernel: toy_model_forward.1
$region0: #{toy_model_forward.1}
  #allocation0 [shape = 'u32[]', space=smem, size = 0x4, offset = 0x4, fixed_abs, tag = 'smem constant byte address 0x4 - core index']
  #allocation1 [shape = 'u32[144,128]{1,0:T(1,128)}', space=vmem, size = 0x12000, scoped, tag = 'internal scratch']
  #allocation2 [shape = 'f32[8,128]{1,0:T(8,128)}', space=vmem, size = 0x1000, scoped, tag = 'scratch operand']
  %s0 = inlined_call_operand.hbm [shape: f32[8,10], index: 0, kind: input, shape index: {}]
  %s1 = inlined_call_operand.hbm [shape: f32[4,128,128], index: 1, kind: input, shape index: {}]
  %s2 = inlined_call_operand.vmem [shape: f32[4,128], index: 2, kind: input, shape index: {}]
  %s3 = inlined_call_operand.hbm [shape: f32[8,128], index: 3, kind: output, shape index: {}]
  %s4 = sld [smem:[#allocation0]]
  $region30: #{toy_model_forward.1} parent=0
    _
  %s6 = ssub.s32 1, %s4
  %s7 = scalar_select 0, %s6, %s4
  $region1: #{toy_model_forward.1} parent=0
    #allocation3 [shape = 'u8[4096]{0}', space=vmem, size = 0x1000, scoped, tag = 'input window, operand 0, single buffered']
    #allocation4 [shape = 's32[1]{0}', space=sflag, size = 0x4, scoped, tag = 'scoped memory for toy_model_forward.1']
    #allocation5 [shape = 's32[1]{0}', space=sflag, size = 0x4, scoped, tag = 'scoped memory for toy_model_forward.1']
    #allocation6 [shape = 'u8[262144]{0}', space=vmem, size = 0x40000, scoped, tag = 'input window, operand 1, single buffered']
    #allocation7 [shape = 's32[1]{0}', space=sflag, size = 0x4, scoped, tag = 'scoped memory for toy_model_forward.1']
    #allocation8 [shape = 'u8[4096]{0}', space=vmem, size = 0x1000, scoped, tag = 'output window, operand 0, single buffered']
    %8 = vsyncpa [#allocation4], 0
    %9 = vsyncpa [#allocation7], 0
    %10 = vsyncpa [#allocation5], 0
    // Predicated region
    $region2: #{toy_model_forward.1} parent=1 // pred_check
      _
    $region3: #{toy_model_forward.1} parent=1 // pred_check_branch
      %12 = sbr.rel (0) target = $region5
    $region4: #{toy_model_forward.1} parent=1 // pred_region
      %s14 = ssub.s32 128, 128
      %15 = vsyncadd [#allocation4], %s14
      %s17 = sshll.u32 [#allocation3], 4
      %s18 = int_to_ptr.vmem [resolvable:$true] %s17
      %20 = dma.hbm_to_vmem [thread:$0]  %s0, 128, %s18, [#allocation4]
    $region5: #{toy_model_forward.1} parent=1 // pred_fallthru
      _
    // Predicated region
    $region6: #{toy_model_forward.1} parent=1 // pred_check
      _
    $region7: #{toy_model_forward.1} parent=1 // pred_check_branch
      %22 = sbr.rel (0) target = $region9
    $region8: #{toy_model_forward.1} parent=1 // pred_region
      %s24 = ssub.s32 8192, 8192
      %25 = vsyncadd [#allocation7], %s24
      %s26 = sshll.u32 [#allocation6], 4
      %s27 = int_to_ptr.vmem [resolvable:$true] %s26
      %32 = dma.hbm_to_vmem [thread:$0]  %s1, 8192, %s27, [#allocation7], 128, 128, 8
    $region9: #{toy_model_forward.1} parent=1 // pred_fallthru
      _
    // Predicated region
    $region10: #{toy_model_forward.1} parent=1 // pred_check
      _
    $region11: #{toy_model_forward.1} parent=1 // pred_check_branch
      %34 = sbr.rel (0) target = $region13
    $region12: #{toy_model_forward.1} parent=1 // pred_region
      _
    $region13: #{toy_model_forward.1} parent=1 // pred_fallthru
      _
    // Predicated region
    $region14: #{toy_model_forward.1} parent=1 // pred_check
      _
    $region15: #{toy_model_forward.1} parent=1 // pred_check_branch
      %36 = sbr.rel (0) target = $region17
    $region16: #{toy_model_forward.1} parent=1 // pred_region
      %37 = dma.done [#allocation4], 128
    $region17: #{toy_model_forward.1} parent=1 // pred_fallthru
      _
    // Predicated region
    $region18: #{toy_model_forward.1} parent=1 // pred_check
      _
    $region19: #{toy_model_forward.1} parent=1 // pred_check_branch
      %39 = sbr.rel (0) target = $region21
    $region20: #{toy_model_forward.1} parent=1 // pred_region
      %40 = dma.done [#allocation7], 8192
    $region21: #{toy_model_forward.1} parent=1 // pred_fallthru
      _
    %41 = vst [vmem:[#allocation2] sm:$0xff] 0.0
    %v42 = vld [vmem:[#allocation3] sm:$0xff]
    %vm43 = vcmask 80896
    %44 = vst.msk [vmem:[#allocation2] sm:$0xff] %vm43, %v42
    %v45 = vld [vmem:[#allocation2] sm:$0xff]
    %v46 = vld [vmem:[#allocation6] sm:$0xff]
    %v47 = vld [vmem:[#allocation6 + $0x8] sm:$0xff]
    %v48 = vld [vmem:[#allocation6 + $0x10] sm:$0xff]
    %v49 = vld [vmem:[#allocation6 + $0x18] sm:$0xff]
    %v50 = vld [vmem:[#allocation6 + $0x20] sm:$0xff]
    %v51 = vld [vmem:[#allocation6 + $0x28] sm:$0xff]
    %v52 = vld [vmem:[#allocation6 + $0x30] sm:$0xff]
    %v53 = vld [vmem:[#allocation6 + $0x38] sm:$0xff]
    %v54 = vld [vmem:[#allocation6 + $0x40] sm:$0xff]
    %v55 = vld [vmem:[#allocation6 + $0x48] sm:$0xff]
    %v56 = vld [vmem:[#allocation6 + $0x50] sm:$0xff]
    %v57 = vld [vmem:[#allocation6 + $0x58] sm:$0xff]
    %v58 = vld [vmem:[#allocation6 + $0x60] sm:$0xff]
    %v59 = vld [vmem:[#allocation6 + $0x68] sm:$0xff]
    %v60 = vld [vmem:[#allocation6 + $0x70] sm:$0xff]
    %v61 = vld [vmem:[#allocation6 + $0x78] sm:$0xff]
    %v62 = vld [vmem:[%s2] sm:$0x1]
    %v63 = vlaneseq
    %v64 = vshrl.u32 %v63, 7
    %v65 = vsub.s32 0, %v64
    %v66 = vrot.slane %v62, %v65
    %67 = vmatprep.subr.mxu0 0.0
    %68 = vmatpush1.msra.mxu0 %v46
    %69 = vmatprep.subr.mxu0 0.0
    %70 = vmatpush1.msra.mxu0 %v47
    %71 = vmatprep.subr.mxu0 0.0
    %72 = vmatpush1.msra.mxu0 %v48
    %73 = vmatprep.subr.mxu0 0.0
    %74 = vmatpush1.msra.mxu0 %v49
    %75 = vmatprep.subr.mxu0 0.0
    %76 = vmatpush1.msra.mxu0 %v50
    %77 = vmatprep.subr.mxu0 0.0
    %78 = vmatpush1.msra.mxu0 %v51
    %79 = vmatprep.subr.mxu0 0.0
    %80 = vmatpush1.msra.mxu0 %v52
    %81 = vmatprep.subr.mxu0 0.0
    %82 = vmatpush1.msra.mxu0 %v53
    %83 = vmatprep.subr.mxu0 0.0
    %84 = vmatpush1.msra.mxu0 %v54
    %85 = vmatprep.subr.mxu0 0.0
    %86 = vmatpush1.msra.mxu0 %v55
    %87 = vmatprep.subr.mxu0 0.0
    %88 = vmatpush1.msra.mxu0 %v56
    %89 = vmatprep.subr.mxu0 0.0
    %90 = vmatpush1.msra.mxu0 %v57
    %91 = vmatprep.subr.mxu0 0.0
    %92 = vmatpush1.msra.mxu0 %v58
    %93 = vmatprep.subr.mxu0 0.0
    %94 = vmatpush1.msra.mxu0 %v59
    %95 = vmatprep.subr.mxu0 0.0
    %96 = vmatpush1.msra.mxu0 %v60
    %97 = vmatprep.subr.mxu0 0.0
    %98 = vmatpush1.msra.mxu0 %v61
    %99 = vmatprep.subr.mxu0 0.0
    %100 = vmatpush1.msra.mxu0 0.0
    %101 = vmatprep.subr.mxu0 0.0
    %102 = vmatpush1.msra.mxu0 0.0
    %103 = vmatprep.subr.mxu0 0.0
    %104 = vmatpush1.msra.mxu0 0.0
    %105 = vmatprep.subr.mxu0 0.0
    %106 = vmatpush1.msra.mxu0 0.0
    %107 = vmatprep.subr.mxu0 0.0
    %108 = vmatpush1.msra.mxu0 0.0
    %109 = vmatprep.subr.mxu0 0.0
    %110 = vmatpush1.msra.mxu0 0.0
    %111 = vmatprep.subr.mxu0 0.0
    %112 = vmatpush1.msra.mxu0 0.0
    %113 = vmatprep.subr.mxu0 0.0
    %114 = vmatpush1.msra.mxu0 0.0
    %115 = vmatprep.subr.mxu0 0.0
    %116 = vmatpush1.msra.mxu0 0.0
    %117 = vmatprep.subr.mxu0 0.0
    %118 = vmatpush1.msra.mxu0 0.0
    %119 = vmatprep.subr.mxu0 0.0
    %120 = vmatpush1.msra.mxu0 0.0
    %121 = vmatprep.subr.mxu0 0.0
    %122 = vmatpush1.msra.mxu0 0.0
    %123 = vmatprep.subr.mxu0 0.0
    %124 = vmatpush1.msra.mxu0 0.0
    %125 = vmatprep.subr.mxu0 0.0
    %126 = vmatpush1.msra.mxu0 0.0
    %127 = vmatprep.subr.mxu0 0.0
    %128 = vmatpush1.msra.mxu0 0.0
    %129 = vmatprep.subr.mxu0 0.0
    %130 = vmatpush1.msra.mxu0 0.0
    %131 = vmatprep.mubr.f32.mxu0 0.0
    %132 = vmatmul.mubr.f32.gmra.mrb[0].mxu0 %v45
    %v133 = vpop.f32.mrb[0].mxu0
    %v134 = vadd.f32 %v66, %v133
    %v135 = vpop.f32.mrb[0].mxu0
    %136 = vdwg.mxu0
    %s137 = scalar_lea.vmem [#allocation6], 128
    %v138 = vld [vmem:[%s137] sm:$0xff]
    %v139 = vld [vmem:[%s137 + $0x8] sm:$0xff]
    %v140 = vld [vmem:[%s137 + $0x10] sm:$0xff]
    %v141 = vld [vmem:[%s137 + $0x18] sm:$0xff]
    %v142 = vld [vmem:[%s137 + $0x20] sm:$0xff]
    %v143 = vld [vmem:[%s137 + $0x28] sm:$0xff]
    %v144 = vld [vmem:[%s137 + $0x30] sm:$0xff]
    %v145 = vld [vmem:[%s137 + $0x38] sm:$0xff]
    %v146 = vld [vmem:[%s137 + $0x40] sm:$0xff]
    %v147 = vld [vmem:[%s137 + $0x48] sm:$0xff]
    %v148 = vld [vmem:[%s137 + $0x50] sm:$0xff]
    %v149 = vld [vmem:[%s137 + $0x58] sm:$0xff]
    %v150 = vld [vmem:[%s137 + $0x60] sm:$0xff]
    %v151 = vld [vmem:[%s137 + $0x68] sm:$0xff]
    %v152 = vld [vmem:[%s137 + $0x70] sm:$0xff]
    %v153 = vld [vmem:[%s137 + $0x78] sm:$0xff]
    %v154 = vld [vmem:[%s2 + $0x1] sm:$0x1]
    %v155 = vlaneseq
    %v156 = vshrl.u32 %v155, 7
    %v157 = vsub.s32 0, %v156
    %v158 = vrot.slane %v154, %v157
    %159 = vmatprep.subr.mxu0 0.0
    %160 = vmatpush1.msra.mxu0 %v138
    %161 = vmatprep.subr.mxu0 0.0
    %162 = vmatpush1.msra.mxu0 %v139
    %163 = vmatprep.subr.mxu0 0.0
    %164 = vmatpush1.msra.mxu0 %v140
    %165 = vmatprep.subr.mxu0 0.0
    %166 = vmatpush1.msra.mxu0 %v141
    %167 = vmatprep.subr.mxu0 0.0
    %168 = vmatpush1.msra.mxu0 %v142
    %169 = vmatprep.subr.mxu0 0.0
    %170 = vmatpush1.msra.mxu0 %v143
    %171 = vmatprep.subr.mxu0 0.0
    %172 = vmatpush1.msra.mxu0 %v144
    %173 = vmatprep.subr.mxu0 0.0
    %174 = vmatpush1.msra.mxu0 %v145
    %175 = vmatprep.subr.mxu0 0.0
    %176 = vmatpush1.msra.mxu0 %v146
    %177 = vmatprep.subr.mxu0 0.0
    %178 = vmatpush1.msra.mxu0 %v147
    %179 = vmatprep.subr.mxu0 0.0
    %180 = vmatpush1.msra.mxu0 %v148
    %181 = vmatprep.subr.mxu0 0.0
    %182 = vmatpush1.msra.mxu0 %v149
    %183 = vmatprep.subr.mxu0 0.0
    %184 = vmatpush1.msra.mxu0 %v150
    %185 = vmatprep.subr.mxu0 0.0
    %186 = vmatpush1.msra.mxu0 %v151
    %187 = vmatprep.subr.mxu0 0.0
    %188 = vmatpush1.msra.mxu0 %v152
    %189 = vmatprep.subr.mxu0 0.0
    %190 = vmatpush1.msra.mxu0 %v153
    %191 = vmatprep.subr.mxu0 0.0
    %192 = vmatpush1.msra.mxu0 0.0
    %193 = vmatprep.subr.mxu0 0.0
    %194 = vmatpush1.msra.mxu0 0.0
    %195 = vmatprep.subr.mxu0 0.0
    %196 = vmatpush1.msra.mxu0 0.0
    %197 = vmatprep.subr.mxu0 0.0
    %198 = vmatpush1.msra.mxu0 0.0
    %199 = vmatprep.subr.mxu0 0.0
    %200 = vmatpush1.msra.mxu0 0.0
    %201 = vmatprep.subr.mxu0 0.0
    %202 = vmatpush1.msra.mxu0 0.0
    %203 = vmatprep.subr.mxu0 0.0
    %204 = vmatpush1.msra.mxu0 0.0
    %205 = vmatprep.subr.mxu0 0.0
    %206 = vmatpush1.msra.mxu0 0.0
    %207 = vmatprep.subr.mxu0 0.0
    %208 = vmatpush1.msra.mxu0 0.0
    %209 = vmatprep.subr.mxu0 0.0
    %210 = vmatpush1.msra.mxu0 0.0
    %211 = vmatprep.subr.mxu0 0.0
    %212 = vmatpush1.msra.mxu0 0.0
    %213 = vmatprep.subr.mxu0 0.0
    %214 = vmatpush1.msra.mxu0 0.0
    %215 = vmatprep.subr.mxu0 0.0
    %216 = vmatpush1.msra.mxu0 0.0
    %217 = vmatprep.subr.mxu0 0.0
    %218 = vmatpush1.msra.mxu0 0.0
    %219 = vmatprep.subr.mxu0 0.0
    %220 = vmatpush1.msra.mxu0 0.0
    %221 = vmatprep.subr.mxu0 0.0
    %222 = vmatpush1.msra.mxu0 0.0
    %223 = vmatprep.mubr.f32.mxu0 0.0
    %224 = vmatmul.mubr.f32.gmra.mrb[0].mxu0 %v134
    %v225 = vpop.f32.mrb[0].mxu0
    %v226 = vadd.f32 %v158, %v225
    %v227 = vpop.f32.mrb[0].mxu0
    %228 = vdwg.mxu0
    %s229 = scalar_lea.vmem [#allocation6], 256
    %v230 = vld [vmem:[%s229] sm:$0xff]
    %v231 = vld [vmem:[%s229 + $0x8] sm:$0xff]
    %v232 = vld [vmem:[%s229 + $0x10] sm:$0xff]
    %v233 = vld [vmem:[%s229 + $0x18] sm:$0xff]
    %v234 = vld [vmem:[%s229 + $0x20] sm:$0xff]
    %v235 = vld [vmem:[%s229 + $0x28] sm:$0xff]
    %v236 = vld [vmem:[%s229 + $0x30] sm:$0xff]
    %v237 = vld [vmem:[%s229 + $0x38] sm:$0xff]
    %v238 = vld [vmem:[%s229 + $0x40] sm:$0xff]
    %v239 = vld [vmem:[%s229 + $0x48] sm:$0xff]
    %v240 = vld [vmem:[%s229 + $0x50] sm:$0xff]
    %v241 = vld [vmem:[%s229 + $0x58] sm:$0xff]
    %v242 = vld [vmem:[%s229 + $0x60] sm:$0xff]
    %v243 = vld [vmem:[%s229 + $0x68] sm:$0xff]
    %v244 = vld [vmem:[%s229 + $0x70] sm:$0xff]
    %v245 = vld [vmem:[%s229 + $0x78] sm:$0xff]
    %v246 = vld [vmem:[%s2 + $0x2] sm:$0x1]
    %v247 = vlaneseq
    %v248 = vshrl.u32 %v247, 7
    %v249 = vsub.s32 0, %v248
    %v250 = vrot.slane %v246, %v249
    %251 = vmatprep.subr.mxu0 0.0
    %252 = vmatpush1.msra.mxu0 %v230
    %253 = vmatprep.subr.mxu0 0.0
    %254 = vmatpush1.msra.mxu0 %v231
    %255 = vmatprep.subr.mxu0 0.0
    %256 = vmatpush1.msra.mxu0 %v232
    %257 = vmatprep.subr.mxu0 0.0
    %258 = vmatpush1.msra.mxu0 %v233
    %259 = vmatprep.subr.mxu0 0.0
    %260 = vmatpush1.msra.mxu0 %v234
    %261 = vmatprep.subr.mxu0 0.0
    %262 = vmatpush1.msra.mxu0 %v235
    %263 = vmatprep.subr.mxu0 0.0
    %264 = vmatpush1.msra.mxu0 %v236
    %265 = vmatprep.subr.mxu0 0.0
    %266 = vmatpush1.msra.mxu0 %v237
    %267 = vmatprep.subr.mxu0 0.0
    %268 = vmatpush1.msra.mxu0 %v238
    %269 = vmatprep.subr.mxu0 0.0
    %270 = vmatpush1.msra.mxu0 %v239
    %271 = vmatprep.subr.mxu0 0.0
    %272 = vmatpush1.msra.mxu0 %v240
    %273 = vmatprep.subr.mxu0 0.0
    %274 = vmatpush1.msra.mxu0 %v241
    %275 = vmatprep.subr.mxu0 0.0
    %276 = vmatpush1.msra.mxu0 %v242
    %277 = vmatprep.subr.mxu0 0.0
    %278 = vmatpush1.msra.mxu0 %v243
    %279 = vmatprep.subr.mxu0 0.0
    %280 = vmatpush1.msra.mxu0 %v244
    %281 = vmatprep.subr.mxu0 0.0
    %282 = vmatpush1.msra.mxu0 %v245
    %283 = vmatprep.subr.mxu0 0.0
    %284 = vmatpush1.msra.mxu0 0.0
    %285 = vmatprep.subr.mxu0 0.0
    %286 = vmatpush1.msra.mxu0 0.0
    %287 = vmatprep.subr.mxu0 0.0
    %288 = vmatpush1.msra.mxu0 0.0
    %289 = vmatprep.subr.mxu0 0.0
    %290 = vmatpush1.msra.mxu0 0.0
    %291 = vmatprep.subr.mxu0 0.0
    %292 = vmatpush1.msra.mxu0 0.0
    %293 = vmatprep.subr.mxu0 0.0
    %294 = vmatpush1.msra.mxu0 0.0
    %295 = vmatprep.subr.mxu0 0.0
    %296 = vmatpush1.msra.mxu0 0.0
    %297 = vmatprep.subr.mxu0 0.0
    %298 = vmatpush1.msra.mxu0 0.0
    %299 = vmatprep.subr.mxu0 0.0
    %300 = vmatpush1.msra.mxu0 0.0
    %301 = vmatprep.subr.mxu0 0.0
    %302 = vmatpush1.msra.mxu0 0.0
    %303 = vmatprep.subr.mxu0 0.0
    %304 = vmatpush1.msra.mxu0 0.0
    %305 = vmatprep.subr.mxu0 0.0
    %306 = vmatpush1.msra.mxu0 0.0
    %307 = vmatprep.subr.mxu0 0.0
    %308 = vmatpush1.msra.mxu0 0.0
    %309 = vmatprep.subr.mxu0 0.0
    %310 = vmatpush1.msra.mxu0 0.0
    %311 = vmatprep.subr.mxu0 0.0
    %312 = vmatpush1.msra.mxu0 0.0
    %313 = vmatprep.subr.mxu0 0.0
    %314 = vmatpush1.msra.mxu0 0.0
    %315 = vmatprep.mubr.f32.mxu0 0.0
    %316 = vmatmul.mubr.f32.gmra.mrb[0].mxu0 %v226
    %v317 = vpop.f32.mrb[0].mxu0
    %v318 = vadd.f32 %v250, %v317
    %v319 = vpop.f32.mrb[0].mxu0
    %320 = vdwg.mxu0
    %s321 = scalar_lea.vmem [#allocation6], 384
    %v322 = vld [vmem:[%s321] sm:$0xff]
    %v323 = vld [vmem:[%s321 + $0x8] sm:$0xff]
    %v324 = vld [vmem:[%s321 + $0x10] sm:$0xff]
    %v325 = vld [vmem:[%s321 + $0x18] sm:$0xff]
    %v326 = vld [vmem:[%s321 + $0x20] sm:$0xff]
    %v327 = vld [vmem:[%s321 + $0x28] sm:$0xff]
    %v328 = vld [vmem:[%s321 + $0x30] sm:$0xff]
    %v329 = vld [vmem:[%s321 + $0x38] sm:$0xff]
    %v330 = vld [vmem:[%s321 + $0x40] sm:$0xff]
    %v331 = vld [vmem:[%s321 + $0x48] sm:$0xff]
    %v332 = vld [vmem:[%s321 + $0x50] sm:$0xff]
    %v333 = vld [vmem:[%s321 + $0x58] sm:$0xff]
    %v334 = vld [vmem:[%s321 + $0x60] sm:$0xff]
    %v335 = vld [vmem:[%s321 + $0x68] sm:$0xff]
    %v336 = vld [vmem:[%s321 + $0x70] sm:$0xff]
    %v337 = vld [vmem:[%s321 + $0x78] sm:$0xff]
    %v338 = vld [vmem:[%s2 + $0x3] sm:$0x1]
    %v339 = vlaneseq
    %v340 = vshrl.u32 %v339, 7
    %v341 = vsub.s32 0, %v340
    %v342 = vrot.slane %v338, %v341
    %343 = vmatprep.subr.mxu0 0.0
    %344 = vmatpush1.msra.mxu0 %v322
    %345 = vmatprep.subr.mxu0 0.0
    %346 = vmatpush1.msra.mxu0 %v323
    %347 = vmatprep.subr.mxu0 0.0
    %348 = vmatpush1.msra.mxu0 %v324
    %349 = vmatprep.subr.mxu0 0.0
    %350 = vmatpush1.msra.mxu0 %v325
    %351 = vmatprep.subr.mxu0 0.0
    %352 = vmatpush1.msra.mxu0 %v326
    %353 = vmatprep.subr.mxu0 0.0
    %354 = vmatpush1.msra.mxu0 %v327
    %355 = vmatprep.subr.mxu0 0.0
    %356 = vmatpush1.msra.mxu0 %v328
    %357 = vmatprep.subr.mxu0 0.0
    %358 = vmatpush1.msra.mxu0 %v329
    %359 = vmatprep.subr.mxu0 0.0
    %360 = vmatpush1.msra.mxu0 %v330
    %361 = vmatprep.subr.mxu0 0.0
    %362 = vmatpush1.msra.mxu0 %v331
    %363 = vmatprep.subr.mxu0 0.0
    %364 = vmatpush1.msra.mxu0 %v332
    %365 = vmatprep.subr.mxu0 0.0
    %366 = vmatpush1.msra.mxu0 %v333
    %367 = vmatprep.subr.mxu0 0.0
    %368 = vmatpush1.msra.mxu0 %v334
    %369 = vmatprep.subr.mxu0 0.0
    %370 = vmatpush1.msra.mxu0 %v335
    %371 = vmatprep.subr.mxu0 0.0
    %372 = vmatpush1.msra.mxu0 %v336
    %373 = vmatprep.subr.mxu0 0.0
    %374 = vmatpush1.msra.mxu0 %v337
    %375 = vmatprep.subr.mxu0 0.0
    %376 = vmatpush1.msra.mxu0 0.0
    %377 = vmatprep.subr.mxu0 0.0
    %378 = vmatpush1.msra.mxu0 0.0
    %379 = vmatprep.subr.mxu0 0.0
    %380 = vmatpush1.msra.mxu0 0.0
    %381 = vmatprep.subr.mxu0 0.0
    %382 = vmatpush1.msra.mxu0 0.0
    %383 = vmatprep.subr.mxu0 0.0
    %384 = vmatpush1.msra.mxu0 0.0
    %385 = vmatprep.subr.mxu0 0.0
    %386 = vmatpush1.msra.mxu0 0.0
    %387 = vmatprep.subr.mxu0 0.0
    %388 = vmatpush1.msra.mxu0 0.0
    %389 = vmatprep.subr.mxu0 0.0
    %390 = vmatpush1.msra.mxu0 0.0
    %391 = vmatprep.subr.mxu0 0.0
    %392 = vmatpush1.msra.mxu0 0.0
    %393 = vmatprep.subr.mxu0 0.0
    %394 = vmatpush1.msra.mxu0 0.0
    %395 = vmatprep.subr.mxu0 0.0
    %396 = vmatpush1.msra.mxu0 0.0
    %397 = vmatprep.subr.mxu0 0.0
    %398 = vmatpush1.msra.mxu0 0.0
    %399 = vmatprep.subr.mxu0 0.0
    %400 = vmatpush1.msra.mxu0 0.0
    %401 = vmatprep.subr.mxu0 0.0
    %402 = vmatpush1.msra.mxu0 0.0
    %403 = vmatprep.subr.mxu0 0.0
    %404 = vmatpush1.msra.mxu0 0.0
    %405 = vmatprep.subr.mxu0 0.0
    %406 = vmatpush1.msra.mxu0 0.0
    %407 = vmatprep.mubr.f32.mxu0 0.0
    %408 = vmatmul.mubr.f32.gmra.mrb[0].mxu0 %v318
    %v409 = vpop.f32.mrb[0].mxu0
    %v410 = vadd.f32 %v342, %v409
    %v411 = vpop.f32.mrb[0].mxu0
    %412 = vdwg.mxu0
    %413 = vst [vmem:[#allocation8] sm:$0xff] %v410
    // Predicated region
    $region22: #{toy_model_forward.1} parent=1 // pred_check
      _
    $region23: #{toy_model_forward.1} parent=1 // pred_check_branch
      %415 = sbr.rel (0) target = $region25
    $region24: #{toy_model_forward.1} parent=1 // pred_region
      %s417 = ssub.s32 128, 128
      %418 = vsyncadd [#allocation5], %s417
      %s420 = sshll.u32 [#allocation8], 4
      %s421 = int_to_ptr.vmem [resolvable:$true] %s420
      %423 = dma.vmem_to_hbm [thread:$0]  %s421, 128, %s3, [#allocation5]
    $region25: #{toy_model_forward.1} parent=1 // pred_fallthru
      _
    // Predicated region
    $region26: #{toy_model_forward.1} parent=1 // pred_check
      _
    $region27: #{toy_model_forward.1} parent=1 // pred_check_branch
      %425 = sbr.rel (0) target = $region29
    $region28: #{toy_model_forward.1} parent=1 // pred_region
      %426 = dma.done [#allocation5], 128
    $region29: #{toy_model_forward.1} parent=1 // pred_fallthru
      _
    %427 = vsyncpa [#allocation4], 1
    %428 = vsyncpa [#allocation7], 1
    %429 = vsyncpa [#allocation5], 1

</llo_original>
